<compile_context>
chip_gen: v6e
topology: v6e:2x2x1
jax: 0.10.0
libtpu: 0.0.40
codegen_flags: <defaults>
</compile_context>

<pallas_src>
import jax
import jax.numpy as jnp
from jax.experimental import pallas as pl
from jax.experimental.pallas import tpu as pltpu


def _round_up(n, m):
    return ((n + m - 1) // m) * m


def _make_fcn_kernel(num_hidden_layers, use_bf16):
    """Fused transposed-MLP kernel.

    Refs (in order): x_t, (W_0, b_0), ..., (W_{H-1}, b_{H-1}), w_last, b_last, out.
      x_t    : (in_pad0, block_m)      activations, batch on lanes
      W_i    : (out_pad_i, in_pad_i)   PyTorch-layout weight (zero padded)
      b_i    : (out_pad_i, 1)          bias column (zero padded)
      w_last : (in_pad_last, 1)        final Linear(hidden, 1) weight as a column
      b_last : (1, 1)                  final bias
      out    : (1, block_m)            lane-dense result row
    """
    mm_dtype = jnp.bfloat16 if use_bf16 else jnp.float32

    def kernel(*refs):
        out_ref = refs[-1]
        h = refs[0][...]                                     # (in_pad0, block_m) f32
        for i in range(num_hidden_layers):
            w = refs[1 + 2 * i][...]                         # (out_pad, in_pad), mm_dtype
            b = refs[2 + 2 * i][...]                         # (out_pad, 1) f32
            acc = jnp.dot(w, h.astype(mm_dtype),
                          preferred_element_type=jnp.float32)
            h = jnp.maximum(acc + b, 0.0)                    # bias broadcast along lanes
        w_last = refs[1 + 2 * num_hidden_layers][...]        # (in_pad_last, 1) f32
        b_last = refs[2 + 2 * num_hidden_layers][...]        # (1, 1) f32
        # Final Linear(hidden, 1): VPU multiply + sublane (XLU) reduce -> lane-dense row.
        r = jnp.sum(h * w_last, axis=0, keepdims=True) + b_last   # (1, block_m)
        out_ref[...] = r.astype(out_ref.dtype)

    return kernel


def fcn_forward(x, params, *, block_m=None, use_bf16=False):
    """Fused FCN forward.

    x:      (B, indim) float32
    params: list of (W, b) in PyTorch layout: W (out_i, in_i), b (out_i,)
            (last layer must have out == 1)
    returns (B, 1) float32
    """
    B, indim = x.shape
    n_layers = len(params)
    n_hidden = n_layers - 1
    assert params[-1][0].shape[0] == 1, "final layer must map to a single output"

    # Per-layer input dims, padded to the 128-lane width.
    in_dims = [indim] + [w.shape[0] for w, _ in params[:-1]]
    in_pads = [_round_up(d, 128) for d in in_dims]

    # Batch tiling: batch lives on the lane axis, so tiles are multiples of 128.
    if block_m is None:
        block_m = min(512, _round_up(B, 128))
    block_m = _round_up(block_m, 128)
    b_pad = _round_up(B, block_m)
    grid = (b_pad // block_m,)

    mm_dtype = jnp.bfloat16 if use_bf16 else jnp.float32

    # Transposed, zero-padded input: (in_pad0, b_pad).
    xt = jnp.zeros((in_pads[0], b_pad), jnp.float32)
    xt = xt.at[:indim, :B].set(x.astype(jnp.float32).T)

    flat_args = [xt]
    in_specs = [pl.BlockSpec((in_pads[0], block_m), lambda i: (0, i))]

    # Hidden layers: zero-padded PyTorch-layout weights + bias columns, fully resident.
    for li in range(n_hidden):
        w, b = params[li]
        out_d, in_d = w.shape
        out_p, in_p = in_pads[li + 1], in_pads[li]
        wp = jnp.zeros((out_p, in_p), jnp.float32).at[:out_d, :in_d].set(
            w.astype(jnp.float32)).astype(mm_dtype)
        bp = jnp.zeros((out_p, 1), jnp.float32).at[:out_d, 0].set(b.astype(jnp.float32))
        flat_args += [wp, bp]
        in_specs += [pl.BlockSpec((out_p, in_p), lambda i: (0, 0)),
                     pl.BlockSpec((out_p, 1), lambda i: (0, 0))]

    # Final Linear(hidden, 1): weight as a zero-padded column, bias as (1, 1).
    w_last, b_last = params[-1]
    in_p_last = in_pads[-1]
    wl = jnp.zeros((in_p_last, 1), jnp.float32).at[:w_last.shape[1], 0].set(
        w_last[0].astype(jnp.float32))
    bl = jnp.reshape(b_last.astype(jnp.float32), (1, 1))
    flat_args += [wl, bl]
    in_specs += [pl.BlockSpec((in_p_last, 1), lambda i: (0, 0)),
                 pl.BlockSpec((1, 1), lambda i: (0, 0))]

    kernel = _make_fcn_kernel(n_hidden, use_bf16)
    out = pl.pallas_call(
        kernel,
        out_shape=jax.ShapeDtypeStruct((1, b_pad), jnp.float32),
        grid=grid,
        in_specs=in_specs,
        out_specs=pl.BlockSpec((1, block_m), lambda i: (0, i)),
        compiler_params=pltpu.CompilerParams(
            dimension_semantics=("parallel",)),  # batch tiles shard across v7x TCs when grid >= 2
    )(*flat_args)

    # Lane-dense (1, B_pad) slab -> (B, 1), dropping batch padding.
    return out[0, :B][:, None]


def init_fcn_params(key, indim, hiddens):
    """Deterministic PyTorch-style init: U(-1/sqrt(fan_in), 1/sqrt(fan_in)), PyTorch layout."""
    dims = [indim] + list(hiddens) + [1]
    params = []
    for i in range(len(dims) - 1):
        key, kw, kb = jax.random.split(key, 3)
        bound = 1.0 / jnp.sqrt(jnp.float32(dims[i]))
        w = jax.random.uniform(kw, (dims[i + 1], dims[i]), jnp.float32, -bound, bound)
        b = jax.random.uniform(kb, (dims[i + 1],), jnp.float32, -bound, bound)
        params.append((w, b))
    return params


def fcn_reference(x, params):
    """Pure-JAX reference matching the PyTorch module."""
    h = x
    for i, (w, b) in enumerate(params):
        h = h @ w.T + b
        if i < len(params) - 1:
            h = jnp.maximum(h, 0.0)
    return h


if __name__ == "__main__":
    key = jax.random.PRNGKey(0)
    # Small configs consistent with the module: default FCN(hiddens=[128], indim=128),
    # plus an odd-shaped deeper one to exercise the 128-padding / multi-layer path.
    configs = [
        dict(indim=128, hiddens=[128], batch=16),
        dict(indim=20, hiddens=[48, 32], batch=10),
    ]
    for cfg in configs:
        key, kx, kp = jax.random.split(key, 3)
        x = jax.random.normal(kx, (cfg["batch"], cfg["indim"]), jnp.float32)
        params = init_fcn_params(kp, cfg["indim"], cfg["hiddens"])

        out = jax.block_until_ready(fcn_forward(x, params))
        ref = fcn_reference(x, params)

        assert out.shape == (cfg["batch"], 1), out.shape
        assert jnp.allclose(out, ref, atol=1e-4, rtol=1e-4), (
            f"Pallas kernel mismatch vs JAX reference for config {cfg}: "
            f"max abs err {float(jnp.max(jnp.abs(out - ref)))}")

    print("KERNEL_OK")
</pallas_src>

<mosaic_0001>
module attributes {stable_mosaic.version = 11 : i64} {
  func.func @kernel(%arg0: i32, %arg1: memref<128x128xf32, #tpu.memory_space<vmem>>, %arg2: memref<128x128xf32, #tpu.memory_space<vmem>>, %arg3: memref<128x1xf32, #tpu.memory_space<vmem>>, %arg4: memref<128x1xf32, #tpu.memory_space<vmem>>, %arg5: memref<1x1xf32, #tpu.memory_space<vmem>>, %arg6: memref<1x128xf32, #tpu.memory_space<vmem>>) attributes {dimension_semantics = [#tpu.dimension_semantics<parallel>], iteration_bounds = array<i64: 1>, scalar_prefetch = 0 : i64, scratch_operands = 0 : i64, tpu.core_type = #tpu.core_type<tc>, window_params = [{transform_indices = @transform_0, window_bounds = array<i64: 128, 128>}, {pipeline_mode = #tpu.pipeline_mode<synchronous>, transform_indices = @transform_1, window_bounds = array<i64: 128, 128>}, {pipeline_mode = #tpu.pipeline_mode<synchronous>, transform_indices = @transform_2, window_bounds = array<i64: 128, 1>}, {pipeline_mode = #tpu.pipeline_mode<synchronous>, transform_indices = @transform_3, window_bounds = array<i64: 128, 1>}, {pipeline_mode = #tpu.pipeline_mode<synchronous>, transform_indices = @transform_4, window_bounds = array<i64: 1, 1>}, {transform_indices = @transform_5, window_bounds = array<i64: 1, 128>}]} {
    %c0 = arith.constant 0 : index
    %c0_0 = arith.constant 0 : index
    %0 = vector.load %arg1[%c0, %c0_0] : memref<128x128xf32, #tpu.memory_space<vmem>>, vector<128x128xf32>
    %c0_1 = arith.constant 0 : index
    %c0_2 = arith.constant 0 : index
    %1 = vector.load %arg2[%c0_1, %c0_2] : memref<128x128xf32, #tpu.memory_space<vmem>>, vector<128x128xf32>
    %c0_3 = arith.constant 0 : index
    %c0_4 = arith.constant 0 : index
    %2 = vector.load %arg3[%c0_3, %c0_4] : memref<128x1xf32, #tpu.memory_space<vmem>>, vector<128x1xf32>
    %cst = arith.constant dense<0.000000e+00> : vector<128x128xf32>
    %3 = tpu.matmul %1, %0, %cst {dimension_numbers = #tpu.dot_dimension_numbers<[1], [0], [0], [1], [0, 0, 1, 1], [], []>} : vector<128x128xf32>, vector<128x128xf32>, vector<128x128xf32> -> vector<128x128xf32>
    %4 = vector.broadcast %2 : vector<128x1xf32> to vector<128x128xf32>
    %5 = arith.addf %3, %4 : vector<128x128xf32>
    %cst_5 = arith.constant 0.000000e+00 : f32
    %6 = vector.broadcast %cst_5 : f32 to vector<128x128xf32>
    %7 = arith.maximumf %5, %6 : vector<128x128xf32>
    %c0_6 = arith.constant 0 : index
    %c0_7 = arith.constant 0 : index
    %8 = vector.load %arg4[%c0_6, %c0_7] : memref<128x1xf32, #tpu.memory_space<vmem>>, vector<128x1xf32>
    %c0_8 = arith.constant 0 : index
    %c0_9 = arith.constant 0 : index
    %9 = vector.load %arg5[%c0_8, %c0_9] : memref<1x1xf32, #tpu.memory_space<vmem>>, vector<1x1xf32>
    %10 = vector.broadcast %8 : vector<128x1xf32> to vector<128x128xf32>
    %11 = arith.mulf %7, %10 : vector<128x128xf32>
    %cst_10 = arith.constant dense<0.000000e+00> : vector<128xf32>
    %12 = vector.multi_reduction <add>, %11, %cst_10 [0] : vector<128x128xf32> to vector<128xf32>
    %13 = vector.shape_cast %12 : vector<128xf32> to vector<1x128xf32>
    %14 = vector.broadcast %9 : vector<1x1xf32> to vector<1x128xf32>
    %15 = arith.addf %13, %14 : vector<1x128xf32>
    %c0_11 = arith.constant 0 : index
    %c0_12 = arith.constant 0 : index
    %16 = vector.load %arg6[%c0_11, %c0_12] : memref<1x128xf32, #tpu.memory_space<vmem>>, vector<1x128xf32>
    tpu.vector_store %arg6[%c0_11, %c0_12], %15 {strides = array<i32>} : memref<1x128xf32, #tpu.memory_space<vmem>>, vector<1x128xf32>,
    return
  }
  func.func @transform_0(%arg0: i32) -> (i32, i32) {
    %c0_i32 = arith.constant 0 : i32
    %c0_i32_0 = arith.constant 0 : i32
    return %c0_i32, %arg0 : i32, i32
  }
  func.func @transform_1(%arg0: i32) -> (i32, i32) {
    %c0_i32 = arith.constant 0 : i32
    %c0_i32_0 = arith.constant 0 : i32
    %c0_i32_1 = arith.constant 0 : i32
    return %c0_i32, %c0_i32_0 : i32, i32
  }
  func.func @transform_2(%arg0: i32) -> (i32, i32) {
    %c0_i32 = arith.constant 0 : i32
    %c0_i32_0 = arith.constant 0 : i32
    %c0_i32_1 = arith.constant 0 : i32
    return %c0_i32, %c0_i32_0 : i32, i32
  }
  func.func @transform_3(%arg0: i32) -> (i32, i32) {
    %c0_i32 = arith.constant 0 : i32
    %c0_i32_0 = arith.constant 0 : i32
    %c0_i32_1 = arith.constant 0 : i32
    return %c0_i32, %c0_i32_0 : i32, i32
  }
  func.func @transform_4(%arg0: i32) -> (i32, i32) {
    %c0_i32 = arith.constant 0 : i32
    %c0_i32_0 = arith.constant 0 : i32
    %c0_i32_1 = arith.constant 0 : i32
    return %c0_i32, %c0_i32_0 : i32, i32
  }
  func.func @transform_5(%arg0: i32) -> (i32, i32) {
    %c0_i32 = arith.constant 0 : i32
    %c0_i32_0 = arith.constant 0 : i32
    return %c0_i32, %arg0 : i32, i32
  }
}

</mosaic_0001>

<llo_original>
// kernel: tpu_custom_call.1
$region0: #{tpu_custom_call.1}
  #allocation0 [shape = 'u32[]', space=smem, size = 0x4, offset = 0x4, fixed_abs, tag = 'smem constant byte address 0x4 - core index']
  #allocation1 [shape = 'u32[144,128]{1,0:T(1,128)}', space=vmem, size = 0x12000, scoped, tag = 'internal scratch']
  #allocation2 [shape = 'f32[1,1]{1,0:T(1,128)S(1)}', space=vmem, size = 0x200, scoped, tag = 'scoped memory for tpu_custom_call.1']
  %s0 = inlined_call_operand.vmem [shape: f32[128,128], index: 0, kind: input, shape index: {}]
  %s1 = inlined_call_operand.vmem [shape: f32[128,128], index: 1, kind: input, shape index: {}]
  %s2 = inlined_call_operand.vmem [shape: f32[128,1], index: 2, kind: input, shape index: {}]
  %s3 = inlined_call_operand.vmem [shape: f32[128,1], index: 3, kind: input, shape index: {}]
  %s4 = inlined_call_operand.<no memory space> [shape: f32[1,1], index: 4, kind: input, shape index: {}]
  %s5 = inlined_call_operand.hbm [shape: f32[1,128], index: 5, kind: output, shape index: {}]
  %s6 = sld [smem:[#allocation0]]
  $region30: #{tpu_custom_call.1} parent=0
    _
  %s8 = ssub.s32 1, %s6
  %s9 = scalar_select 0, %s8, %s6
  %v10 = vstv %s4
  %11 = vst [vmem:[#allocation2] sm:$0x1] %v10
  $region1: #{tpu_custom_call.1} parent=0
    #allocation3 [shape = 'u8[512]{0}', space=vmem, size = 0x400, scoped, tag = 'output window, operand 0, single buffered']
    #allocation4 [shape = 's32[1]{0}', space=sflag, size = 0x4, scoped, tag = 'scoped memory for tpu_custom_call.1']
    %12 = vsyncpa [#allocation4], 0
    // Predicated region
    $region2: #{tpu_custom_call.1} parent=1 // pred_check
      _
    $region3: #{tpu_custom_call.1} parent=1 // pred_check_branch
      %14 = sbr.rel (0) target = $region5
    $region4: #{tpu_custom_call.1} parent=1 // pred_region
      _
    $region5: #{tpu_custom_call.1} parent=1 // pred_fallthru
      _
    // Predicated region
    $region6: #{tpu_custom_call.1} parent=1 // pred_check
      _
    $region7: #{tpu_custom_call.1} parent=1 // pred_check_branch
      %16 = sbr.rel (0) target = $region9
    $region8: #{tpu_custom_call.1} parent=1 // pred_region
      _
    $region9: #{tpu_custom_call.1} parent=1 // pred_fallthru
      _
    // Predicated region
    $region10: #{tpu_custom_call.1} parent=1 // pred_check
      _
    $region11: #{tpu_custom_call.1} parent=1 // pred_check_branch
      %18 = sbr.rel (0) target = $region13
    $region12: #{tpu_custom_call.1} parent=1 // pred_region
      _
    $region13: #{tpu_custom_call.1} parent=1 // pred_fallthru
      _
    // Predicated region
    $region14: #{tpu_custom_call.1} parent=1 // pred_check
      _
    $region15: #{tpu_custom_call.1} parent=1 // pred_check_branch
      %20 = sbr.rel (0) target = $region17
    $region16: #{tpu_custom_call.1} parent=1 // pred_region
      _
    $region17: #{tpu_custom_call.1} parent=1 // pred_fallthru
      _
    // Predicated region
    $region18: #{tpu_custom_call.1} parent=1 // pred_check
      _
    $region19: #{tpu_custom_call.1} parent=1 // pred_check_branch
      %22 = sbr.rel (0) target = $region21
    $region20: #{tpu_custom_call.1} parent=1 // pred_region
      _
    $region21: #{tpu_custom_call.1} parent=1 // pred_fallthru
      _
    %v23 = vld [vmem:[%s0] sm:$0xff]
    %v24 = vld [vmem:[%s0 + $0x8] sm:$0xff]
    %v25 = vld [vmem:[%s0 + $0x10] sm:$0xff]
    %v26 = vld [vmem:[%s0 + $0x18] sm:$0xff]
    %v27 = vld [vmem:[%s0 + $0x20] sm:$0xff]
    %v28 = vld [vmem:[%s0 + $0x28] sm:$0xff]
    %v29 = vld [vmem:[%s0 + $0x30] sm:$0xff]
    %v30 = vld [vmem:[%s0 + $0x38] sm:$0xff]
    %v31 = vld [vmem:[%s0 + $0x40] sm:$0xff]
    %v32 = vld [vmem:[%s0 + $0x48] sm:$0xff]
    %v33 = vld [vmem:[%s0 + $0x50] sm:$0xff]
    %v34 = vld [vmem:[%s0 + $0x58] sm:$0xff]
    %v35 = vld [vmem:[%s0 + $0x60] sm:$0xff]
    %v36 = vld [vmem:[%s0 + $0x68] sm:$0xff]
    %v37 = vld [vmem:[%s0 + $0x70] sm:$0xff]
    %v38 = vld [vmem:[%s0 + $0x78] sm:$0xff]
    %v39 = vld [vmem:[%s1] sm:$0xff]
    %v40 = vld [vmem:[%s1 + $0x8] sm:$0xff]
    %v41 = vld [vmem:[%s1 + $0x10] sm:$0xff]
    %v42 = vld [vmem:[%s1 + $0x18] sm:$0xff]
    %v43 = vld [vmem:[%s1 + $0x20] sm:$0xff]
    %v44 = vld [vmem:[%s1 + $0x28] sm:$0xff]
    %v45 = vld [vmem:[%s1 + $0x30] sm:$0xff]
    %v46 = vld [vmem:[%s1 + $0x38] sm:$0xff]
    %v47 = vld [vmem:[%s1 + $0x40] sm:$0xff]
    %v48 = vld [vmem:[%s1 + $0x48] sm:$0xff]
    %v49 = vld [vmem:[%s1 + $0x50] sm:$0xff]
    %v50 = vld [vmem:[%s1 + $0x58] sm:$0xff]
    %v51 = vld [vmem:[%s1 + $0x60] sm:$0xff]
    %v52 = vld [vmem:[%s1 + $0x68] sm:$0xff]
    %v53 = vld [vmem:[%s1 + $0x70] sm:$0xff]
    %v54 = vld [vmem:[%s1 + $0x78] sm:$0xff]
    %v55 = vld [vmem:[%s2] sm:$0xff]
    %v56 = vld [vmem:[%s2 + $0x8] sm:$0xff]
    %v57 = vld [vmem:[%s2 + $0x10] sm:$0xff]
    %v58 = vld [vmem:[%s2 + $0x18] sm:$0xff]
    %v59 = vld [vmem:[%s2 + $0x20] sm:$0xff]
    %v60 = vld [vmem:[%s2 + $0x28] sm:$0xff]
    %v61 = vld [vmem:[%s2 + $0x30] sm:$0xff]
    %v62 = vld [vmem:[%s2 + $0x38] sm:$0xff]
    %v63 = vld [vmem:[%s2 + $0x40] sm:$0xff]
    %v64 = vld [vmem:[%s2 + $0x48] sm:$0xff]
    %v65 = vld [vmem:[%s2 + $0x50] sm:$0xff]
    %v66 = vld [vmem:[%s2 + $0x58] sm:$0xff]
    %v67 = vld [vmem:[%s2 + $0x60] sm:$0xff]
    %v68 = vld [vmem:[%s2 + $0x68] sm:$0xff]
    %v69 = vld [vmem:[%s2 + $0x70] sm:$0xff]
    %v70 = vld [vmem:[%s2 + $0x78] sm:$0xff]
    %72 = vset.pattern.permute.xlu0 0
    %73 = vperm.xlu0 %72, %v55
    %v74 = vpop.permute.xlu0 %73
    %77 = vset.pattern.permute.xlu0 0
    %78 = vperm.xlu0 %77, %v56
    %v79 = vpop.permute.xlu0 %78
    %82 = vset.pattern.permute.xlu0 0
    %83 = vperm.xlu0 %82, %v57
    %v84 = vpop.permute.xlu0 %83
    %87 = vset.pattern.permute.xlu0 0
    %88 = vperm.xlu0 %87, %v58
    %v89 = vpop.permute.xlu0 %88
    %92 = vset.pattern.permute.xlu0 0
    %93 = vperm.xlu0 %92, %v59
    %v94 = vpop.permute.xlu0 %93
    %97 = vset.pattern.permute.xlu0 0
    %98 = vperm.xlu0 %97, %v60
    %v99 = vpop.permute.xlu0 %98
    %102 = vset.pattern.permute.xlu0 0
    %103 = vperm.xlu0 %102, %v61
    %v104 = vpop.permute.xlu0 %103
    %107 = vset.pattern.permute.xlu0 0
    %108 = vperm.xlu0 %107, %v62
    %v109 = vpop.permute.xlu0 %108
    %112 = vset.pattern.permute.xlu0 0
    %113 = vperm.xlu0 %112, %v63
    %v114 = vpop.permute.xlu0 %113
    %117 = vset.pattern.permute.xlu0 0
    %118 = vperm.xlu0 %117, %v64
    %v119 = vpop.permute.xlu0 %118
    %122 = vset.pattern.permute.xlu0 0
    %123 = vperm.xlu0 %122, %v65
    %v124 = vpop.permute.xlu0 %123
    %127 = vset.pattern.permute.xlu0 0
    %128 = vperm.xlu0 %127, %v66
    %v129 = vpop.permute.xlu0 %128
    %132 = vset.pattern.permute.xlu0 0
    %133 = vperm.xlu0 %132, %v67
    %v134 = vpop.permute.xlu0 %133
    %137 = vset.pattern.permute.xlu0 0
    %138 = vperm.xlu0 %137, %v68
    %v139 = vpop.permute.xlu0 %138
    %142 = vset.pattern.permute.xlu0 0
    %143 = vperm.xlu0 %142, %v69
    %v144 = vpop.permute.xlu0 %143
    %147 = vset.pattern.permute.xlu0 0
    %148 = vperm.xlu0 %147, %v70
    %v149 = vpop.permute.xlu0 %148
    %151 = vmatprep.subr.mxu0 0.0
    %152 = vmatpush1.msra.mxu0 %v38
    %153 = vmatprep.subr.mxu0 0.0
    %154 = vmatpush1.msra.mxu0 %v37
    %155 = vmatprep.subr.mxu0 0.0
    %156 = vmatpush1.msra.mxu0 %v36
    %157 = vmatprep.subr.mxu0 0.0
    %158 = vmatpush1.msra.mxu0 %v35
    %159 = vmatprep.subr.mxu0 0.0
    %160 = vmatpush1.msra.mxu0 %v34
    %161 = vmatprep.subr.mxu0 0.0
    %162 = vmatpush1.msra.mxu0 %v33
    %163 = vmatprep.subr.mxu0 0.0
    %164 = vmatpush1.msra.mxu0 %v32
    %165 = vmatprep.subr.mxu0 0.0
    %166 = vmatpush1.msra.mxu0 %v31
    %167 = vmatprep.subr.mxu0 0.0
    %168 = vmatpush1.msra.mxu0 %v30
    %169 = vmatprep.subr.mxu0 0.0
    %170 = vmatpush1.msra.mxu0 %v29
    %171 = vmatprep.subr.mxu0 0.0
    %172 = vmatpush1.msra.mxu0 %v28
    %173 = vmatprep.subr.mxu0 0.0
    %174 = vmatpush1.msra.mxu0 %v27
    %175 = vmatprep.subr.mxu0 0.0
    %176 = vmatpush1.msra.mxu0 %v26
    %177 = vmatprep.subr.mxu0 0.0
    %178 = vmatpush1.msra.mxu0 %v25
    %179 = vmatprep.subr.mxu0 0.0
    %180 = vmatpush1.msra.mxu0 %v24
    %181 = vmatprep.subr.mxu0 0.0
    %182 = vmatpush1.msra.mxu0 %v23
    %183 = vmatprep.subr.mxu0 0.0
    %184 = vmatpush2.msra.mxu0 0.0
    %185 = vmatprep.subr.mxu0 0.0
    %186 = vmatpush2.msra.mxu0 0.0
    %187 = vmatprep.subr.mxu0 0.0
    %188 = vmatpush2.msra.mxu0 0.0
    %189 = vmatprep.subr.mxu0 0.0
    %190 = vmatpush2.msra.mxu0 0.0
    %191 = vmatprep.subr.mxu0 0.0
    %192 = vmatpush2.msra.mxu0 0.0
    %193 = vmatprep.subr.mxu0 0.0
    %194 = vmatpush2.msra.mxu0 0.0
    %195 = vmatprep.subr.mxu0 0.0
    %196 = vmatpush2.msra.mxu0 0.0
    %197 = vmatprep.subr.mxu0 0.0
    %198 = vmatpush2.msra.mxu0 0.0
    %199 = vmatprep.subr.mxu0 0.0
    %200 = vmatpush2.msra.mxu0 0.0
    %201 = vmatprep.subr.mxu0 0.0
    %202 = vmatpush2.msra.mxu0 0.0
    %203 = vmatprep.subr.mxu0 0.0
    %204 = vmatpush2.msra.mxu0 0.0
    %205 = vmatprep.subr.mxu0 0.0
    %206 = vmatpush2.msra.mxu0 0.0
    %207 = vmatprep.subr.mxu0 0.0
    %208 = vmatpush2.msra.mxu0 0.0
    %209 = vmatprep.subr.mxu0 0.0
    %210 = vmatpush2.msra.mxu0 0.0
    %211 = vmatprep.subr.mxu0 0.0
    %212 = vmatpush2.msra.mxu0 0.0
    %213 = vmatprep.subr.mxu0 0.0
    %214 = vmatpush2.msra.mxu0 0.0
    %215 = vmatprep.mubr.f32.mxu0 0.0
    %216 = vmatmul.mubr.f32.gmra.mxu0 %v39
    %v217 = vpop.f32.mrf.mxu0
    %v218 = vadd.f32 %v74, %v217
    %v219 = vpop.f32.mrf.mxu0
    %220 = vmatprep.mubr.f32.mxu0 0.0
    %221 = vmatmul.mubr.f32.gmra.mxu0 %v40
    %v222 = vpop.f32.mrf.mxu0
    %v223 = vadd.f32 %v79, %v222
    %v224 = vpop.f32.mrf.mxu0
    %225 = vmatprep.mubr.f32.mxu0 0.0
    %226 = vmatmul.mubr.f32.gmra.mxu0 %v41
    %v227 = vpop.f32.mrf.mxu0
    %v228 = vadd.f32 %v84, %v227
    %v229 = vpop.f32.mrf.mxu0
    %230 = vmatprep.mubr.f32.mxu0 0.0
    %231 = vmatmul.mubr.f32.gmra.mxu0 %v42
    %v232 = vpop.f32.mrf.mxu0
    %v233 = vadd.f32 %v89, %v232
    %v234 = vpop.f32.mrf.mxu0
    %235 = vmatprep.mubr.f32.mxu0 0.0
    %236 = vmatmul.mubr.f32.gmra.mxu0 %v43
    %v237 = vpop.f32.mrf.mxu0
    %v238 = vadd.f32 %v94, %v237
    %v239 = vpop.f32.mrf.mxu0
    %240 = vmatprep.mubr.f32.mxu0 0.0
    %241 = vmatmul.mubr.f32.gmra.mxu0 %v44
    %v242 = vpop.f32.mrf.mxu0
    %v243 = vadd.f32 %v99, %v242
    %v244 = vpop.f32.mrf.mxu0
    %245 = vmatprep.mubr.f32.mxu0 0.0
    %246 = vmatmul.mubr.f32.gmra.mxu0 %v45
    %v247 = vpop.f32.mrf.mxu0
    %v248 = vadd.f32 %v104, %v247
    %v249 = vpop.f32.mrf.mxu0
    %250 = vmatprep.mubr.f32.mxu0 0.0
    %251 = vmatmul.mubr.f32.gmra.mxu0 %v46
    %v252 = vpop.f32.mrf.mxu0
    %v253 = vadd.f32 %v109, %v252
    %v254 = vpop.f32.mrf.mxu0
    %255 = vmatprep.mubr.f32.mxu0 0.0
    %256 = vmatmul.mubr.f32.gmra.mxu0 %v47
    %v257 = vpop.f32.mrf.mxu0
    %v258 = vadd.f32 %v114, %v257
    %v259 = vpop.f32.mrf.mxu0
    %260 = vmatprep.mubr.f32.mxu0 0.0
    %261 = vmatmul.mubr.f32.gmra.mxu0 %v48
    %v262 = vpop.f32.mrf.mxu0
    %v263 = vadd.f32 %v119, %v262
    %v264 = vpop.f32.mrf.mxu0
    %265 = vmatprep.mubr.f32.mxu0 0.0
    %266 = vmatmul.mubr.f32.gmra.mxu0 %v49
    %v267 = vpop.f32.mrf.mxu0
    %v268 = vadd.f32 %v124, %v267
    %v269 = vpop.f32.mrf.mxu0
    %270 = vmatprep.mubr.f32.mxu0 0.0
    %271 = vmatmul.mubr.f32.gmra.mxu0 %v50
    %v272 = vpop.f32.mrf.mxu0
    %v273 = vadd.f32 %v129, %v272
    %v274 = vpop.f32.mrf.mxu0
    %275 = vmatprep.mubr.f32.mxu0 0.0
    %276 = vmatmul.mubr.f32.gmra.mxu0 %v51
    %v277 = vpop.f32.mrf.mxu0
    %v278 = vadd.f32 %v134, %v277
    %v279 = vpop.f32.mrf.mxu0
    %280 = vmatprep.mubr.f32.mxu0 0.0
    %281 = vmatmul.mubr.f32.gmra.mxu0 %v52
    %v282 = vpop.f32.mrf.mxu0
    %v283 = vadd.f32 %v139, %v282
    %v284 = vpop.f32.mrf.mxu0
    %285 = vmatprep.mubr.f32.mxu0 0.0
    %286 = vmatmul.mubr.f32.gmra.mxu0 %v53
    %v287 = vpop.f32.mrf.mxu0
    %v288 = vadd.f32 %v144, %v287
    %v289 = vpop.f32.mrf.mxu0
    %290 = vmatprep.mubr.f32.mxu0 0.0
    %291 = vmatmul.mubr.f32.gmra.mxu0 %v54
    %v292 = vpop.f32.mrf.mxu0
    %v293 = vadd.f32 %v149, %v292
    %v294 = vpop.f32.mrf.mxu0
    %295 = vdwg.mxu0
    %v296 = vmax.f32 %v218, 0.0
    %v297 = vmax.f32 %v223, 0.0
    %v298 = vmax.f32 %v228, 0.0
    %v299 = vmax.f32 %v233, 0.0
    %v300 = vmax.f32 %v238, 0.0
    %v301 = vmax.f32 %v243, 0.0
    %v302 = vmax.f32 %v248, 0.0
    %v303 = vmax.f32 %v253, 0.0
    %v304 = vmax.f32 %v258, 0.0
    %v305 = vmax.f32 %v263, 0.0
    %v306 = vmax.f32 %v268, 0.0
    %v307 = vmax.f32 %v273, 0.0
    %v308 = vmax.f32 %v278, 0.0
    %v309 = vmax.f32 %v283, 0.0
    %v310 = vmax.f32 %v288, 0.0
    %v311 = vmax.f32 %v293, 0.0
    %v312 = vld [vmem:[%s3] sm:$0xff]
    %v313 = vld [vmem:[%s3 + $0x8] sm:$0xff]
    %v314 = vld [vmem:[%s3 + $0x10] sm:$0xff]
    %v315 = vld [vmem:[%s3 + $0x18] sm:$0xff]
    %v316 = vld [vmem:[%s3 + $0x20] sm:$0xff]
    %v317 = vld [vmem:[%s3 + $0x28] sm:$0xff]
    %v318 = vld [vmem:[%s3 + $0x30] sm:$0xff]
    %v319 = vld [vmem:[%s3 + $0x38] sm:$0xff]
    %v320 = vld [vmem:[%s3 + $0x40] sm:$0xff]
    %v321 = vld [vmem:[%s3 + $0x48] sm:$0xff]
    %v322 = vld [vmem:[%s3 + $0x50] sm:$0xff]
    %v323 = vld [vmem:[%s3 + $0x58] sm:$0xff]
    %v324 = vld [vmem:[%s3 + $0x60] sm:$0xff]
    %v325 = vld [vmem:[%s3 + $0x68] sm:$0xff]
    %v326 = vld [vmem:[%s3 + $0x70] sm:$0xff]
    %v327 = vld [vmem:[%s3 + $0x78] sm:$0xff]
    %v328 = vld [vmem:[#allocation2] sm:$0x1]
    %330 = vset.pattern.permute.xlu0 0
    %331 = vperm.xlu0 %330, %v312
    %v332 = vpop.permute.xlu0 %331
    %335 = vset.pattern.permute.xlu0 0
    %336 = vperm.xlu0 %335, %v313
    %v337 = vpop.permute.xlu0 %336
    %340 = vset.pattern.permute.xlu0 0
    %341 = vperm.xlu0 %340, %v314
    %v342 = vpop.permute.xlu0 %341
    %345 = vset.pattern.permute.xlu0 0
    %346 = vperm.xlu0 %345, %v315
    %v347 = vpop.permute.xlu0 %346
    %350 = vset.pattern.permute.xlu0 0
    %351 = vperm.xlu0 %350, %v316
    %v352 = vpop.permute.xlu0 %351
    %355 = vset.pattern.permute.xlu0 0
    %356 = vperm.xlu0 %355, %v317
    %v357 = vpop.permute.xlu0 %356
    %360 = vset.pattern.permute.xlu0 0
    %361 = vperm.xlu0 %360, %v318
    %v362 = vpop.permute.xlu0 %361
    %365 = vset.pattern.permute.xlu0 0
    %366 = vperm.xlu0 %365, %v319
    %v367 = vpop.permute.xlu0 %366
    %370 = vset.pattern.permute.xlu0 0
    %371 = vperm.xlu0 %370, %v320
    %v372 = vpop.permute.xlu0 %371
    %375 = vset.pattern.permute.xlu0 0
    %376 = vperm.xlu0 %375, %v321
    %v377 = vpop.permute.xlu0 %376
    %380 = vset.pattern.permute.xlu0 0
    %381 = vperm.xlu0 %380, %v322
    %v382 = vpop.permute.xlu0 %381
    %385 = vset.pattern.permute.xlu0 0
    %386 = vperm.xlu0 %385, %v323
    %v387 = vpop.permute.xlu0 %386
    %390 = vset.pattern.permute.xlu0 0
    %391 = vperm.xlu0 %390, %v324
    %v392 = vpop.permute.xlu0 %391
    %395 = vset.pattern.permute.xlu0 0
    %396 = vperm.xlu0 %395, %v325
    %v397 = vpop.permute.xlu0 %396
    %400 = vset.pattern.permute.xlu0 0
    %401 = vperm.xlu0 %400, %v326
    %v402 = vpop.permute.xlu0 %401
    %405 = vset.pattern.permute.xlu0 0
    %406 = vperm.xlu0 %405, %v327
    %v407 = vpop.permute.xlu0 %406
    %v409 = vmul.f32 %v296, %v332
    %v410 = vmul.f32 %v297, %v337
    %v411 = vmul.f32 %v298, %v342
    %v412 = vmul.f32 %v299, %v347
    %v413 = vmul.f32 %v300, %v352
    %v414 = vmul.f32 %v301, %v357
    %v415 = vmul.f32 %v302, %v362
    %v416 = vmul.f32 %v303, %v367
    %v417 = vmul.f32 %v304, %v372
    %v418 = vmul.f32 %v305, %v377
    %v419 = vmul.f32 %v306, %v382
    %v420 = vmul.f32 %v307, %v387
    %v421 = vmul.f32 %v308, %v392
    %v422 = vmul.f32 %v309, %v397
    %v423 = vmul.f32 %v310, %v402
    %v424 = vmul.f32 %v311, %v407
    %v425 = vadd.f32 %v409, %v410
    %v426 = vadd.f32 %v425, %v411
    %v427 = vadd.f32 %v426, %v412
    %v428 = vadd.f32 %v427, %v413
    %v429 = vadd.f32 %v428, %v414
    %v430 = vadd.f32 %v429, %v415
    %v431 = vadd.f32 %v430, %v416
    %v432 = vadd.f32 %v431, %v417
    %v433 = vadd.f32 %v432, %v418
    %v434 = vadd.f32 %v433, %v419
    %v435 = vadd.f32 %v434, %v420
    %v436 = vadd.f32 %v435, %v421
    %v437 = vadd.f32 %v436, %v422
    %v438 = vadd.f32 %v437, %v423
    %v439 = vadd.f32 %v438, %v424
    %v440 = vrot.slane %v439, 4
    %v441 = vadd.f32 %v439, %v440
    %v442 = vrot.slane %v441, 2
    %v443 = vadd.f32 %v441, %v442
    %v444 = vrot.slane %v443, 1
    %v445 = vadd.f32 %v443, %v444
    %447 = vset.pattern.permute.xlu0 0
    %448 = vperm.xlu0 %447, %v328
    %v449 = vpop.permute.xlu0 %448
    %v451 = vlaneseq
    %v452 = vshrl.u32 %v451, 7
    %v453 = vsub.s32 0, %v452
    %v454 = vrot.slane %v449, %v453
    %v455 = vadd.f32 %v445, %v454
    %456 = vst [vmem:[#allocation3] sm:$0x1] %v455
    // Predicated region
    $region22: #{tpu_custom_call.1} parent=1 // pred_check
      _
    $region23: #{tpu_custom_call.1} parent=1 // pred_check_branch
      %458 = sbr.rel (0) target = $region25
    $region24: #{tpu_custom_call.1} parent=1 // pred_region
      %s460 = ssub.s32 16, 16
      %461 = vsyncadd [#allocation4], %s460
      %s463 = sshll.u32 [#allocation3], 4
      %s464 = int_to_ptr.vmem [resolvable:$true] %s463
      %466 = dma.vmem_to_hbm [thread:$0]  %s464, 16, %s5, [#allocation4]
    $region25: #{tpu_custom_call.1} parent=1 // pred_fallthru
      _
    // Predicated region
    $region26: #{tpu_custom_call.1} parent=1 // pred_check
      _
    $region27: #{tpu_custom_call.1} parent=1 // pred_check_branch
      %468 = sbr.rel (0) target = $region29
    $region28: #{tpu_custom_call.1} parent=1 // pred_region
      %469 = dma.done [#allocation4], 16
    $region29: #{tpu_custom_call.1} parent=1 // pred_fallthru
      _
    %470 = vsyncpa [#allocation4], 1

</llo_original>
